<compile_context>
chip_gen: v5e
topology: v5e:2x2
jax: 0.10.0
libtpu: 0.0.40
codegen_flags: <defaults>
</compile_context>

<pallas_src>
import jax
import jax.numpy as jnp
import numpy as np
from jax.experimental import pallas as pl
from jax.experimental.pallas import tpu as pltpu

POOL = 6            # pool_kernels[0] = (1, 6, 6)
IN_FEATURES = 1024  # nn.Linear(in_features=1024, ...)
OUT_FEATURES = 10


def prepare_fc_params(fc_weight, fc_bias, pooled_cols):
    """One-time re-layout of the constant fc parameters (do NOT call per step).

    Returns:
      wg:   (pooled_cols, 10, R) with wg[j, o, r] = fc_weight[o, r*pooled_cols + j]
      bias: (10, 1)
    """
    r = IN_FEATURES // pooled_cols
    w = jnp.asarray(fc_weight, jnp.float32).reshape(OUT_FEATURES, r, pooled_cols)
    wg = jnp.transpose(w, (2, 0, 1))                               # (W2, 10, R)
    b = jnp.asarray(fc_bias, jnp.float32).reshape(OUT_FEATURES, 1)  # (10, 1)
    return wg, b


@jax.jit
def general_ee_model_forward(x, wg, bias_col):
    """x: (1, C, D, H, W) float32 with C * D * (H//6) * (W//6) == 1024.
    wg, bias_col: outputs of prepare_fc_params (constant weight re-layout)."""
    n, c, d, h, w = x.shape
    assert n == 1, "GeneralEEModel.forward only runs for x.shape[0] == 1"
    h2, w2 = h // POOL, w // POOL
    r = c * d * h2
    assert r * w2 == IN_FEATURES, "flattened pooled size must be 1024"
    assert wg.shape == (w2, OUT_FEATURES, r)

    # Layout glue only: floor-mode crop (no-op when H, W are multiples of 6) plus a
    # contiguous row-major reshape (bitcast, no HBM copy).
    #   a[rr*6 + kh, j*6 + kw] = x[0, ci, di, 6*hi + kh, 6*j + kw],  rr = (ci*D+di)*H2+hi
    xc = x[:, :, :, : h2 * POOL, : w2 * POOL]
    a = xc.reshape(r * POOL, w2 * POOL).astype(jnp.float32)

    def kernel(a_ref, w_ref, b_ref, o_ref):
        # a_ref: (R*6, W2*6)  rows = (c,d,h2,kh), lanes = (w2,kw)
        # w_ref: (W2, 10, R)  pre-permuted fc weight
        # b_ref: (10, 1)      fc bias
        # o_ref: (10, 1)      scores (column)
        # --- MaxPool over kh: sublane-strided loads + VPU maximums ---
        m = a_ref[pl.ds(0, r, stride=POOL), :]
        for kh in range(1, POOL):
            m = jnp.maximum(m, a_ref[pl.ds(kh, r, stride=POOL), :])
        # --- MaxPool over kw + Linear: per pooled column, lane max then MXU matvec ---
        scores = b_ref[...]
        for j in range(w2):
            col = jnp.max(m[:, j * POOL:(j + 1) * POOL], axis=1, keepdims=True)  # (R, 1)
            scores = scores + jnp.dot(w_ref[j], col,
                                      preferred_element_type=jnp.float32)        # (10, 1)
        o_ref[...] = scores

    out = pl.pallas_call(
        kernel,
        out_shape=jax.ShapeDtypeStruct((OUT_FEATURES, 1), jnp.float32),
        in_specs=[
            pl.BlockSpec(memory_space=pltpu.MemorySpace.VMEM),
            pl.BlockSpec(memory_space=pltpu.MemorySpace.VMEM),
            pl.BlockSpec(memory_space=pltpu.MemorySpace.VMEM),
        ],
        out_specs=pl.BlockSpec(memory_space=pltpu.MemorySpace.VMEM),
    )(a, wg, bias_col)
    return out.reshape(1, OUT_FEATURES)  # free bitcast to torch's (1, 10) score layout


def _reference(x, fc_weight, fc_bias):
    """Pure-JAX reference mirroring the torch forward (eval-mode dropout)."""
    n, c, d, h, w = x.shape
    h2, w2 = h // POOL, w // POOL
    xc = x[:, :, :, : h2 * POOL, : w2 * POOL]
    pooled = xc.reshape(n, c, d, h2, POOL, w2, POOL).max(axis=(4, 6))
    flat = pooled.reshape(n, -1)                                   # torch Flatten order
    return flat @ fc_weight.T + fc_bias


if __name__ == "__main__":
    key = jax.random.PRNGKey(0)
    kx, kw, kb = jax.random.split(key, 3)

    # Small shapes consistent with the module: C*D*(H//6)*(W//6) = 4*4*8*8 = 1024.
    N, C, D, H, W = 1, 4, 4, 48, 48
    x = jax.random.normal(kx, (N, C, D, H, W), dtype=jnp.float32)

    # Deterministic fc params (torch nn.Linear default: U(-1/sqrt(fan_in), ...)).
    bound = 1.0 / np.sqrt(IN_FEATURES)
    fc_weight = jax.random.uniform(
        kw, (OUT_FEATURES, IN_FEATURES), minval=-bound, maxval=bound,
        dtype=jnp.float32)
    fc_bias = jax.random.uniform(
        kb, (OUT_FEATURES,), minval=-bound, maxval=bound, dtype=jnp.float32)

    # One-time constant weight re-layout (outside the forward / timing path).
    wg, bias_col = prepare_fc_params(fc_weight, fc_bias, pooled_cols=W // POOL)

    scores = general_ee_model_forward(x, wg, bias_col)
    scores = jax.block_until_ready(scores)

    ref = _reference(x, fc_weight, fc_bias)
    assert scores.shape == (1, OUT_FEATURES)
    np.testing.assert_allclose(
        np.asarray(scores), np.asarray(ref), rtol=1e-5, atol=1e-5)

    print("KERNEL_OK")
</pallas_src>

<mosaic_0001>
module attributes {stable_mosaic.version = 11 : i64} {
  func.func @kernel(%arg0: memref<768x48xf32, #tpu.memory_space<vmem>>, %arg1: memref<8x10x128xf32, #tpu.memory_space<vmem>>, %arg2: memref<10x1xf32, #tpu.memory_space<vmem>>, %arg3: memref<10x1xf32, #tpu.memory_space<vmem>>) attributes {dimension_semantics = [], scalar_prefetch = 0 : i64, scratch_operands = 0 : i64, tpu.core_type = #tpu.core_type<tc>} {
    %c0 = arith.constant 0 : index
    %c0_0 = arith.constant 0 : index
    %0 = tpu.strided_load %arg0[%c0, %c0_0] {strides = array<i32: 6, 1>} : memref<768x48xf32, #tpu.memory_space<vmem>>, vector<128x48xf32>
    %c1 = arith.constant 1 : index
    %c0_1 = arith.constant 0 : index
    %1 = tpu.strided_load %arg0[%c1, %c0_1] {strides = array<i32: 6, 1>} : memref<768x48xf32, #tpu.memory_space<vmem>>, vector<128x48xf32>
    %2 = arith.maximumf %0, %1 : vector<128x48xf32>
    %c2 = arith.constant 2 : index
    %c0_2 = arith.constant 0 : index
    %3 = tpu.strided_load %arg0[%c2, %c0_2] {strides = array<i32: 6, 1>} : memref<768x48xf32, #tpu.memory_space<vmem>>, vector<128x48xf32>
    %4 = arith.maximumf %2, %3 : vector<128x48xf32>
    %c3 = arith.constant 3 : index
    %c0_3 = arith.constant 0 : index
    %5 = tpu.strided_load %arg0[%c3, %c0_3] {strides = array<i32: 6, 1>} : memref<768x48xf32, #tpu.memory_space<vmem>>, vector<128x48xf32>
    %6 = arith.maximumf %4, %5 : vector<128x48xf32>
    %c4 = arith.constant 4 : index
    %c0_4 = arith.constant 0 : index
    %7 = tpu.strided_load %arg0[%c4, %c0_4] {strides = array<i32: 6, 1>} : memref<768x48xf32, #tpu.memory_space<vmem>>, vector<128x48xf32>
    %8 = arith.maximumf %6, %7 : vector<128x48xf32>
    %c5 = arith.constant 5 : index
    %c0_5 = arith.constant 0 : index
    %9 = tpu.strided_load %arg0[%c5, %c0_5] {strides = array<i32: 6, 1>} : memref<768x48xf32, #tpu.memory_space<vmem>>, vector<128x48xf32>
    %10 = arith.maximumf %8, %9 : vector<128x48xf32>
    %c0_6 = arith.constant 0 : index
    %c0_7 = arith.constant 0 : index
    %11 = vector.load %arg2[%c0_6, %c0_7] : memref<10x1xf32, #tpu.memory_space<vmem>>, vector<10x1xf32>
    %12 = vector.extract_strided_slice %10 {offsets = [0, 0], sizes = [128, 6], strides = [1, 1]} : vector<128x48xf32> to vector<128x6xf32>
    %cst = arith.constant dense<0xFF800000> : vector<128xf32>
    %13 = vector.multi_reduction <maximumf>, %12, %cst [1] : vector<128x6xf32> to vector<128xf32>
    %14 = vector.shape_cast %13 : vector<128xf32> to vector<128x1xf32>
    %c0_8 = arith.constant 0 : index
    %c0_9 = arith.constant 0 : index
    %c0_10 = arith.constant 0 : index
    %15 = vector.load %arg1[%c0_8, %c0_9, %c0_10] : memref<8x10x128xf32, #tpu.memory_space<vmem>>, vector<1x10x128xf32>
    %16 = vector.shape_cast %15 : vector<1x10x128xf32> to vector<10x128xf32>
    %cst_11 = arith.constant dense<0.000000e+00> : vector<10x1xf32>
    %17 = tpu.matmul %16, %14, %cst_11 {dimension_numbers = #tpu.dot_dimension_numbers<[1], [0], [0], [1], [0, 0, 1, 1], [], []>} : vector<10x128xf32>, vector<128x1xf32>, vector<10x1xf32> -> vector<10x1xf32>
    %18 = arith.addf %11, %17 : vector<10x1xf32>
    %19 = vector.extract_strided_slice %10 {offsets = [0, 6], sizes = [128, 6], strides = [1, 1]} : vector<128x48xf32> to vector<128x6xf32>
    %cst_12 = arith.constant dense<0xFF800000> : vector<128xf32>
    %20 = vector.multi_reduction <maximumf>, %19, %cst_12 [1] : vector<128x6xf32> to vector<128xf32>
    %21 = vector.shape_cast %20 : vector<128xf32> to vector<128x1xf32>
    %c1_13 = arith.constant 1 : index
    %c0_14 = arith.constant 0 : index
    %c0_15 = arith.constant 0 : index
    %22 = vector.load %arg1[%c1_13, %c0_14, %c0_15] : memref<8x10x128xf32, #tpu.memory_space<vmem>>, vector<1x10x128xf32>
    %23 = vector.shape_cast %22 : vector<1x10x128xf32> to vector<10x128xf32>
    %cst_16 = arith.constant dense<0.000000e+00> : vector<10x1xf32>
    %24 = tpu.matmul %23, %21, %cst_16 {dimension_numbers = #tpu.dot_dimension_numbers<[1], [0], [0], [1], [0, 0, 1, 1], [], []>} : vector<10x128xf32>, vector<128x1xf32>, vector<10x1xf32> -> vector<10x1xf32>
    %25 = arith.addf %18, %24 : vector<10x1xf32>
    %26 = vector.extract_strided_slice %10 {offsets = [0, 12], sizes = [128, 6], strides = [1, 1]} : vector<128x48xf32> to vector<128x6xf32>
    %cst_17 = arith.constant dense<0xFF800000> : vector<128xf32>
    %27 = vector.multi_reduction <maximumf>, %26, %cst_17 [1] : vector<128x6xf32> to vector<128xf32>
    %28 = vector.shape_cast %27 : vector<128xf32> to vector<128x1xf32>
    %c2_18 = arith.constant 2 : index
    %c0_19 = arith.constant 0 : index
    %c0_20 = arith.constant 0 : index
    %29 = vector.load %arg1[%c2_18, %c0_19, %c0_20] : memref<8x10x128xf32, #tpu.memory_space<vmem>>, vector<1x10x128xf32>
    %30 = vector.shape_cast %29 : vector<1x10x128xf32> to vector<10x128xf32>
    %cst_21 = arith.constant dense<0.000000e+00> : vector<10x1xf32>
    %31 = tpu.matmul %30, %28, %cst_21 {dimension_numbers = #tpu.dot_dimension_numbers<[1], [0], [0], [1], [0, 0, 1, 1], [], []>} : vector<10x128xf32>, vector<128x1xf32>, vector<10x1xf32> -> vector<10x1xf32>
    %32 = arith.addf %25, %31 : vector<10x1xf32>
    %33 = vector.extract_strided_slice %10 {offsets = [0, 18], sizes = [128, 6], strides = [1, 1]} : vector<128x48xf32> to vector<128x6xf32>
    %cst_22 = arith.constant dense<0xFF800000> : vector<128xf32>
    %34 = vector.multi_reduction <maximumf>, %33, %cst_22 [1] : vector<128x6xf32> to vector<128xf32>
    %35 = vector.shape_cast %34 : vector<128xf32> to vector<128x1xf32>
    %c3_23 = arith.constant 3 : index
    %c0_24 = arith.constant 0 : index
    %c0_25 = arith.constant 0 : index
    %36 = vector.load %arg1[%c3_23, %c0_24, %c0_25] : memref<8x10x128xf32, #tpu.memory_space<vmem>>, vector<1x10x128xf32>
    %37 = vector.shape_cast %36 : vector<1x10x128xf32> to vector<10x128xf32>
    %cst_26 = arith.constant dense<0.000000e+00> : vector<10x1xf32>
    %38 = tpu.matmul %37, %35, %cst_26 {dimension_numbers = #tpu.dot_dimension_numbers<[1], [0], [0], [1], [0, 0, 1, 1], [], []>} : vector<10x128xf32>, vector<128x1xf32>, vector<10x1xf32> -> vector<10x1xf32>
    %39 = arith.addf %32, %38 : vector<10x1xf32>
    %40 = vector.extract_strided_slice %10 {offsets = [0, 24], sizes = [128, 6], strides = [1, 1]} : vector<128x48xf32> to vector<128x6xf32>
    %cst_27 = arith.constant dense<0xFF800000> : vector<128xf32>
    %41 = vector.multi_reduction <maximumf>, %40, %cst_27 [1] : vector<128x6xf32> to vector<128xf32>
    %42 = vector.shape_cast %41 : vector<128xf32> to vector<128x1xf32>
    %c4_28 = arith.constant 4 : index
    %c0_29 = arith.constant 0 : index
    %c0_30 = arith.constant 0 : index
    %43 = vector.load %arg1[%c4_28, %c0_29, %c0_30] : memref<8x10x128xf32, #tpu.memory_space<vmem>>, vector<1x10x128xf32>
    %44 = vector.shape_cast %43 : vector<1x10x128xf32> to vector<10x128xf32>
    %cst_31 = arith.constant dense<0.000000e+00> : vector<10x1xf32>
    %45 = tpu.matmul %44, %42, %cst_31 {dimension_numbers = #tpu.dot_dimension_numbers<[1], [0], [0], [1], [0, 0, 1, 1], [], []>} : vector<10x128xf32>, vector<128x1xf32>, vector<10x1xf32> -> vector<10x1xf32>
    %46 = arith.addf %39, %45 : vector<10x1xf32>
    %47 = vector.extract_strided_slice %10 {offsets = [0, 30], sizes = [128, 6], strides = [1, 1]} : vector<128x48xf32> to vector<128x6xf32>
    %cst_32 = arith.constant dense<0xFF800000> : vector<128xf32>
    %48 = vector.multi_reduction <maximumf>, %47, %cst_32 [1] : vector<128x6xf32> to vector<128xf32>
    %49 = vector.shape_cast %48 : vector<128xf32> to vector<128x1xf32>
    %c5_33 = arith.constant 5 : index
    %c0_34 = arith.constant 0 : index
    %c0_35 = arith.constant 0 : index
    %50 = vector.load %arg1[%c5_33, %c0_34, %c0_35] : memref<8x10x128xf32, #tpu.memory_space<vmem>>, vector<1x10x128xf32>
    %51 = vector.shape_cast %50 : vector<1x10x128xf32> to vector<10x128xf32>
    %cst_36 = arith.constant dense<0.000000e+00> : vector<10x1xf32>
    %52 = tpu.matmul %51, %49, %cst_36 {dimension_numbers = #tpu.dot_dimension_numbers<[1], [0], [0], [1], [0, 0, 1, 1], [], []>} : vector<10x128xf32>, vector<128x1xf32>, vector<10x1xf32> -> vector<10x1xf32>
    %53 = arith.addf %46, %52 : vector<10x1xf32>
    %54 = vector.extract_strided_slice %10 {offsets = [0, 36], sizes = [128, 6], strides = [1, 1]} : vector<128x48xf32> to vector<128x6xf32>
    %cst_37 = arith.constant dense<0xFF800000> : vector<128xf32>
    %55 = vector.multi_reduction <maximumf>, %54, %cst_37 [1] : vector<128x6xf32> to vector<128xf32>
    %56 = vector.shape_cast %55 : vector<128xf32> to vector<128x1xf32>
    %c6 = arith.constant 6 : index
    %c0_38 = arith.constant 0 : index
    %c0_39 = arith.constant 0 : index
    %57 = vector.load %arg1[%c6, %c0_38, %c0_39] : memref<8x10x128xf32, #tpu.memory_space<vmem>>, vector<1x10x128xf32>
    %58 = vector.shape_cast %57 : vector<1x10x128xf32> to vector<10x128xf32>
    %cst_40 = arith.constant dense<0.000000e+00> : vector<10x1xf32>
    %59 = tpu.matmul %58, %56, %cst_40 {dimension_numbers = #tpu.dot_dimension_numbers<[1], [0], [0], [1], [0, 0, 1, 1], [], []>} : vector<10x128xf32>, vector<128x1xf32>, vector<10x1xf32> -> vector<10x1xf32>
    %60 = arith.addf %53, %59 : vector<10x1xf32>
    %61 = vector.extract_strided_slice %10 {offsets = [0, 42], sizes = [128, 6], strides = [1, 1]} : vector<128x48xf32> to vector<128x6xf32>
    %cst_41 = arith.constant dense<0xFF800000> : vector<128xf32>
    %62 = vector.multi_reduction <maximumf>, %61, %cst_41 [1] : vector<128x6xf32> to vector<128xf32>
    %63 = vector.shape_cast %62 : vector<128xf32> to vector<128x1xf32>
    %c7 = arith.constant 7 : index
    %c0_42 = arith.constant 0 : index
    %c0_43 = arith.constant 0 : index
    %64 = vector.load %arg1[%c7, %c0_42, %c0_43] : memref<8x10x128xf32, #tpu.memory_space<vmem>>, vector<1x10x128xf32>
    %65 = vector.shape_cast %64 : vector<1x10x128xf32> to vector<10x128xf32>
    %cst_44 = arith.constant dense<0.000000e+00> : vector<10x1xf32>
    %66 = tpu.matmul %65, %63, %cst_44 {dimension_numbers = #tpu.dot_dimension_numbers<[1], [0], [0], [1], [0, 0, 1, 1], [], []>} : vector<10x128xf32>, vector<128x1xf32>, vector<10x1xf32> -> vector<10x1xf32>
    %67 = arith.addf %60, %66 : vector<10x1xf32>
    %c0_45 = arith.constant 0 : index
    %c0_46 = arith.constant 0 : index
    %68 = vector.load %arg3[%c0_45, %c0_46] : memref<10x1xf32, #tpu.memory_space<vmem>>, vector<10x1xf32>
    tpu.vector_store %arg3[%c0_45, %c0_46], %67 {strides = array<i32>} : memref<10x1xf32, #tpu.memory_space<vmem>>, vector<10x1xf32>,
    return
  }
}

</mosaic_0001>

<llo_original>
// kernel: general_ee_model_forward.1
$region0: #{general_ee_model_forward.1}
  #allocation0 [shape = 'u32[]', space=smem, size = 0x4, offset = 0x4, fixed_abs, tag = 'smem constant byte address 0x4 - core index']
  #allocation1 [shape = 'u32[72,128]{1,0:T(1,128)}', space=vmem, size = 0x9000, scoped, tag = 'internal scratch']
  %s0 = inlined_call_operand.hbm [shape: f32[768,48], index: 0, kind: input, shape index: {}]
  %s1 = inlined_call_operand.vmem [shape: f32[8,10,128], index: 1, kind: input, shape index: {}]
  %s2 = inlined_call_operand.vmem [shape: f32[10,1], index: 2, kind: input, shape index: {}]
  %s3 = inlined_call_operand.vmem [shape: f32[10,1], index: 3, kind: output, shape index: {}]
  %s4 = sld [smem:[#allocation0]]
  $region26: #{general_ee_model_forward.1} parent=0
    _
  %s6 = ssub.s32 1, %s4
  %s7 = scalar_select 0, %s6, %s4
  $region1: #{general_ee_model_forward.1} parent=0
    #allocation2 [shape = 'u8[393216]{0}', space=vmem, size = 0x60000, scoped, tag = 'input window, operand 0, single buffered']
    #allocation3 [shape = 's32[1]{0}', space=sflag, size = 0x4, scoped, tag = 'scoped memory for general_ee_model_forward.1']
    %8 = vsyncpa [#allocation3], 0
    // Predicated region
    $region2: #{general_ee_model_forward.1} parent=1 // pred_check
      _
    $region3: #{general_ee_model_forward.1} parent=1 // pred_check_branch
      %10 = sbr.rel (0) target = $region5
    $region4: #{general_ee_model_forward.1} parent=1 // pred_region
      %12 = vsyncadd [#allocation3], 0
      %s13 = sshll.u32 %s0, 4
      %s14 = int_to_ptr.hbm [resolvable:$true] %s13
      %s15 = sshll.u32 [#allocation2], 4
      %s16 = int_to_ptr.vmem [resolvable:$true] %s15
      %21 = dma.hbm_to_vmem [thread:$0]  %s14, 12288, %s16, [#allocation3], 128, 128, 8
    $region5: #{general_ee_model_forward.1} parent=1 // pred_fallthru
      _
    // Predicated region
    $region6: #{general_ee_model_forward.1} parent=1 // pred_check
      _
    $region7: #{general_ee_model_forward.1} parent=1 // pred_check_branch
      %23 = sbr.rel (0) target = $region9
    $region8: #{general_ee_model_forward.1} parent=1 // pred_region
      _
    $region9: #{general_ee_model_forward.1} parent=1 // pred_fallthru
      _
    // Predicated region
    $region10: #{general_ee_model_forward.1} parent=1 // pred_check
      _
    $region11: #{general_ee_model_forward.1} parent=1 // pred_check_branch
      %25 = sbr.rel (0) target = $region13
    $region12: #{general_ee_model_forward.1} parent=1 // pred_region
      _
    $region13: #{general_ee_model_forward.1} parent=1 // pred_fallthru
      _
    // Predicated region
    $region14: #{general_ee_model_forward.1} parent=1 // pred_check
      _
    $region15: #{general_ee_model_forward.1} parent=1 // pred_check_branch
      %27 = sbr.rel (0) target = $region17
    $region16: #{general_ee_model_forward.1} parent=1 // pred_region
      %29 = dma.done [#allocation3], 12288
    $region17: #{general_ee_model_forward.1} parent=1 // pred_fallthru
      _
    %v30 = vld [vmem:[#allocation2] ss:$6 sm:$0xff]
    %s31 = scalar_lea.vmem [#allocation2], 48
    %v32 = vld [vmem:[%s31] ss:$6 sm:$0xff]
    %s33 = scalar_lea.vmem [#allocation2], 96
    %v34 = vld [vmem:[%s33] ss:$6 sm:$0xff]
    %s35 = scalar_lea.vmem [#allocation2], 144
    %v36 = vld [vmem:[%s35] ss:$6 sm:$0xff]
    %s37 = scalar_lea.vmem [#allocation2], 192
    %v38 = vld [vmem:[%s37] ss:$6 sm:$0xff]
    %s39 = scalar_lea.vmem [#allocation2], 240
    %v40 = vld [vmem:[%s39] ss:$6 sm:$0xff]
    %s41 = scalar_lea.vmem [#allocation2], 288
    %v42 = vld [vmem:[%s41] ss:$6 sm:$0xff]
    %s43 = scalar_lea.vmem [#allocation2], 336
    %v44 = vld [vmem:[%s43] ss:$6 sm:$0xff]
    %s45 = scalar_lea.vmem [#allocation2], 384
    %v46 = vld [vmem:[%s45] ss:$6 sm:$0xff]
    %s47 = scalar_lea.vmem [#allocation2], 432
    %v48 = vld [vmem:[%s47] ss:$6 sm:$0xff]
    %s49 = scalar_lea.vmem [#allocation2], 480
    %v50 = vld [vmem:[%s49] ss:$6 sm:$0xff]
    %s51 = scalar_lea.vmem [#allocation2], 528
    %v52 = vld [vmem:[%s51] ss:$6 sm:$0xff]
    %s53 = scalar_lea.vmem [#allocation2], 576
    %v54 = vld [vmem:[%s53] ss:$6 sm:$0xff]
    %s55 = scalar_lea.vmem [#allocation2], 624
    %v56 = vld [vmem:[%s55] ss:$6 sm:$0xff]
    %s57 = scalar_lea.vmem [#allocation2], 672
    %v58 = vld [vmem:[%s57] ss:$6 sm:$0xff]
    %s59 = scalar_lea.vmem [#allocation2], 720
    %v60 = vld [vmem:[%s59] ss:$6 sm:$0xff]
    %s61 = scalar_lea.vmem [#allocation2], 1
    %v62 = vld [vmem:[%s61] ss:$6 sm:$0xff]
    %s63 = scalar_lea.vmem [#allocation2], 49
    %v64 = vld [vmem:[%s63] ss:$6 sm:$0xff]
    %s65 = scalar_lea.vmem [#allocation2], 97
    %v66 = vld [vmem:[%s65] ss:$6 sm:$0xff]
    %s67 = scalar_lea.vmem [#allocation2], 145
    %v68 = vld [vmem:[%s67] ss:$6 sm:$0xff]
    %s69 = scalar_lea.vmem [#allocation2], 193
    %v70 = vld [vmem:[%s69] ss:$6 sm:$0xff]
    %s71 = scalar_lea.vmem [#allocation2], 241
    %v72 = vld [vmem:[%s71] ss:$6 sm:$0xff]
    %s73 = scalar_lea.vmem [#allocation2], 289
    %v74 = vld [vmem:[%s73] ss:$6 sm:$0xff]
    %s75 = scalar_lea.vmem [#allocation2], 337
    %v76 = vld [vmem:[%s75] ss:$6 sm:$0xff]
    %s77 = scalar_lea.vmem [#allocation2], 385
    %v78 = vld [vmem:[%s77] ss:$6 sm:$0xff]
    %s79 = scalar_lea.vmem [#allocation2], 433
    %v80 = vld [vmem:[%s79] ss:$6 sm:$0xff]
    %s81 = scalar_lea.vmem [#allocation2], 481
    %v82 = vld [vmem:[%s81] ss:$6 sm:$0xff]
    %s83 = scalar_lea.vmem [#allocation2], 529
    %v84 = vld [vmem:[%s83] ss:$6 sm:$0xff]
    %s85 = scalar_lea.vmem [#allocation2], 577
    %v86 = vld [vmem:[%s85] ss:$6 sm:$0xff]
    %s87 = scalar_lea.vmem [#allocation2], 625
    %v88 = vld [vmem:[%s87] ss:$6 sm:$0xff]
    %s89 = scalar_lea.vmem [#allocation2], 673
    %v90 = vld [vmem:[%s89] ss:$6 sm:$0xff]
    %s91 = scalar_lea.vmem [#allocation2], 721
    %v92 = vld [vmem:[%s91] ss:$6 sm:$0xff]
    %v93 = vmax.f32 %v30, %v62
    %v94 = vmax.f32 %v32, %v64
    %v95 = vmax.f32 %v34, %v66
    %v96 = vmax.f32 %v36, %v68
    %v97 = vmax.f32 %v38, %v70
    %v98 = vmax.f32 %v40, %v72
    %v99 = vmax.f32 %v42, %v74
    %v100 = vmax.f32 %v44, %v76
    %v101 = vmax.f32 %v46, %v78
    %v102 = vmax.f32 %v48, %v80
    %v103 = vmax.f32 %v50, %v82
    %v104 = vmax.f32 %v52, %v84
    %v105 = vmax.f32 %v54, %v86
    %v106 = vmax.f32 %v56, %v88
    %v107 = vmax.f32 %v58, %v90
    %v108 = vmax.f32 %v60, %v92
    %s109 = scalar_lea.vmem [#allocation2], 2
    %v110 = vld [vmem:[%s109] ss:$6 sm:$0xff]
    %s111 = scalar_lea.vmem [#allocation2], 50
    %v112 = vld [vmem:[%s111] ss:$6 sm:$0xff]
    %s113 = scalar_lea.vmem [#allocation2], 98
    %v114 = vld [vmem:[%s113] ss:$6 sm:$0xff]
    %s115 = scalar_lea.vmem [#allocation2], 146
    %v116 = vld [vmem:[%s115] ss:$6 sm:$0xff]
    %s117 = scalar_lea.vmem [#allocation2], 194
    %v118 = vld [vmem:[%s117] ss:$6 sm:$0xff]
    %s119 = scalar_lea.vmem [#allocation2], 242
    %v120 = vld [vmem:[%s119] ss:$6 sm:$0xff]
    %s121 = scalar_lea.vmem [#allocation2], 290
    %v122 = vld [vmem:[%s121] ss:$6 sm:$0xff]
    %s123 = scalar_lea.vmem [#allocation2], 338
    %v124 = vld [vmem:[%s123] ss:$6 sm:$0xff]
    %s125 = scalar_lea.vmem [#allocation2], 386
    %v126 = vld [vmem:[%s125] ss:$6 sm:$0xff]
    %s127 = scalar_lea.vmem [#allocation2], 434
    %v128 = vld [vmem:[%s127] ss:$6 sm:$0xff]
    %s129 = scalar_lea.vmem [#allocation2], 482
    %v130 = vld [vmem:[%s129] ss:$6 sm:$0xff]
    %s131 = scalar_lea.vmem [#allocation2], 530
    %v132 = vld [vmem:[%s131] ss:$6 sm:$0xff]
    %s133 = scalar_lea.vmem [#allocation2], 578
    %v134 = vld [vmem:[%s133] ss:$6 sm:$0xff]
    %s135 = scalar_lea.vmem [#allocation2], 626
    %v136 = vld [vmem:[%s135] ss:$6 sm:$0xff]
    %s137 = scalar_lea.vmem [#allocation2], 674
    %v138 = vld [vmem:[%s137] ss:$6 sm:$0xff]
    %s139 = scalar_lea.vmem [#allocation2], 722
    %v140 = vld [vmem:[%s139] ss:$6 sm:$0xff]
    %v141 = vmax.f32 %v93, %v110
    %v142 = vmax.f32 %v94, %v112
    %v143 = vmax.f32 %v95, %v114
    %v144 = vmax.f32 %v96, %v116
    %v145 = vmax.f32 %v97, %v118
    %v146 = vmax.f32 %v98, %v120
    %v147 = vmax.f32 %v99, %v122
    %v148 = vmax.f32 %v100, %v124
    %v149 = vmax.f32 %v101, %v126
    %v150 = vmax.f32 %v102, %v128
    %v151 = vmax.f32 %v103, %v130
    %v152 = vmax.f32 %v104, %v132
    %v153 = vmax.f32 %v105, %v134
    %v154 = vmax.f32 %v106, %v136
    %v155 = vmax.f32 %v107, %v138
    %v156 = vmax.f32 %v108, %v140
    %s157 = scalar_lea.vmem [#allocation2], 3
    %v158 = vld [vmem:[%s157] ss:$6 sm:$0xff]
    %s159 = scalar_lea.vmem [#allocation2], 51
    %v160 = vld [vmem:[%s159] ss:$6 sm:$0xff]
    %s161 = scalar_lea.vmem [#allocation2], 99
    %v162 = vld [vmem:[%s161] ss:$6 sm:$0xff]
    %s163 = scalar_lea.vmem [#allocation2], 147
    %v164 = vld [vmem:[%s163] ss:$6 sm:$0xff]
    %s165 = scalar_lea.vmem [#allocation2], 195
    %v166 = vld [vmem:[%s165] ss:$6 sm:$0xff]
    %s167 = scalar_lea.vmem [#allocation2], 243
    %v168 = vld [vmem:[%s167] ss:$6 sm:$0xff]
    %s169 = scalar_lea.vmem [#allocation2], 291
    %v170 = vld [vmem:[%s169] ss:$6 sm:$0xff]
    %s171 = scalar_lea.vmem [#allocation2], 339
    %v172 = vld [vmem:[%s171] ss:$6 sm:$0xff]
    %s173 = scalar_lea.vmem [#allocation2], 387
    %v174 = vld [vmem:[%s173] ss:$6 sm:$0xff]
    %s175 = scalar_lea.vmem [#allocation2], 435
    %v176 = vld [vmem:[%s175] ss:$6 sm:$0xff]
    %s177 = scalar_lea.vmem [#allocation2], 483
    %v178 = vld [vmem:[%s177] ss:$6 sm:$0xff]
    %s179 = scalar_lea.vmem [#allocation2], 531
    %v180 = vld [vmem:[%s179] ss:$6 sm:$0xff]
    %s181 = scalar_lea.vmem [#allocation2], 579
    %v182 = vld [vmem:[%s181] ss:$6 sm:$0xff]
    %s183 = scalar_lea.vmem [#allocation2], 627
    %v184 = vld [vmem:[%s183] ss:$6 sm:$0xff]
    %s185 = scalar_lea.vmem [#allocation2], 675
    %v186 = vld [vmem:[%s185] ss:$6 sm:$0xff]
    %s187 = scalar_lea.vmem [#allocation2], 723
    %v188 = vld [vmem:[%s187] ss:$6 sm:$0xff]
    %v189 = vmax.f32 %v141, %v158
    %v190 = vmax.f32 %v142, %v160
    %v191 = vmax.f32 %v143, %v162
    %v192 = vmax.f32 %v144, %v164
    %v193 = vmax.f32 %v145, %v166
    %v194 = vmax.f32 %v146, %v168
    %v195 = vmax.f32 %v147, %v170
    %v196 = vmax.f32 %v148, %v172
    %v197 = vmax.f32 %v149, %v174
    %v198 = vmax.f32 %v150, %v176
    %v199 = vmax.f32 %v151, %v178
    %v200 = vmax.f32 %v152, %v180
    %v201 = vmax.f32 %v153, %v182
    %v202 = vmax.f32 %v154, %v184
    %v203 = vmax.f32 %v155, %v186
    %v204 = vmax.f32 %v156, %v188
    %s205 = scalar_lea.vmem [#allocation2], 4
    %v206 = vld [vmem:[%s205] ss:$6 sm:$0xff]
    %s207 = scalar_lea.vmem [#allocation2], 52
    %v208 = vld [vmem:[%s207] ss:$6 sm:$0xff]
    %s209 = scalar_lea.vmem [#allocation2], 100
    %v210 = vld [vmem:[%s209] ss:$6 sm:$0xff]
    %s211 = scalar_lea.vmem [#allocation2], 148
    %v212 = vld [vmem:[%s211] ss:$6 sm:$0xff]
    %s213 = scalar_lea.vmem [#allocation2], 196
    %v214 = vld [vmem:[%s213] ss:$6 sm:$0xff]
    %s215 = scalar_lea.vmem [#allocation2], 244
    %v216 = vld [vmem:[%s215] ss:$6 sm:$0xff]
    %s217 = scalar_lea.vmem [#allocation2], 292
    %v218 = vld [vmem:[%s217] ss:$6 sm:$0xff]
    %s219 = scalar_lea.vmem [#allocation2], 340
    %v220 = vld [vmem:[%s219] ss:$6 sm:$0xff]
    %s221 = scalar_lea.vmem [#allocation2], 388
    %v222 = vld [vmem:[%s221] ss:$6 sm:$0xff]
    %s223 = scalar_lea.vmem [#allocation2], 436
    %v224 = vld [vmem:[%s223] ss:$6 sm:$0xff]
    %s225 = scalar_lea.vmem [#allocation2], 484
    %v226 = vld [vmem:[%s225] ss:$6 sm:$0xff]
    %s227 = scalar_lea.vmem [#allocation2], 532
    %v228 = vld [vmem:[%s227] ss:$6 sm:$0xff]
    %s229 = scalar_lea.vmem [#allocation2], 580
    %v230 = vld [vmem:[%s229] ss:$6 sm:$0xff]
    %s231 = scalar_lea.vmem [#allocation2], 628
    %v232 = vld [vmem:[%s231] ss:$6 sm:$0xff]
    %s233 = scalar_lea.vmem [#allocation2], 676
    %v234 = vld [vmem:[%s233] ss:$6 sm:$0xff]
    %s235 = scalar_lea.vmem [#allocation2], 724
    %v236 = vld [vmem:[%s235] ss:$6 sm:$0xff]
    %v237 = vmax.f32 %v189, %v206
    %v238 = vmax.f32 %v190, %v208
    %v239 = vmax.f32 %v191, %v210
    %v240 = vmax.f32 %v192, %v212
    %v241 = vmax.f32 %v193, %v214
    %v242 = vmax.f32 %v194, %v216
    %v243 = vmax.f32 %v195, %v218
    %v244 = vmax.f32 %v196, %v220
    %v245 = vmax.f32 %v197, %v222
    %v246 = vmax.f32 %v198, %v224
    %v247 = vmax.f32 %v199, %v226
    %v248 = vmax.f32 %v200, %v228
    %v249 = vmax.f32 %v201, %v230
    %v250 = vmax.f32 %v202, %v232
    %v251 = vmax.f32 %v203, %v234
    %v252 = vmax.f32 %v204, %v236
    %s253 = scalar_lea.vmem [#allocation2], 5
    %v254 = vld [vmem:[%s253] ss:$6 sm:$0xff]
    %s255 = scalar_lea.vmem [#allocation2], 53
    %v256 = vld [vmem:[%s255] ss:$6 sm:$0xff]
    %s257 = scalar_lea.vmem [#allocation2], 101
    %v258 = vld [vmem:[%s257] ss:$6 sm:$0xff]
    %s259 = scalar_lea.vmem [#allocation2], 149
    %v260 = vld [vmem:[%s259] ss:$6 sm:$0xff]
    %s261 = scalar_lea.vmem [#allocation2], 197
    %v262 = vld [vmem:[%s261] ss:$6 sm:$0xff]
    %s263 = scalar_lea.vmem [#allocation2], 245
    %v264 = vld [vmem:[%s263] ss:$6 sm:$0xff]
    %s265 = scalar_lea.vmem [#allocation2], 293
    %v266 = vld [vmem:[%s265] ss:$6 sm:$0xff]
    %s267 = scalar_lea.vmem [#allocation2], 341
    %v268 = vld [vmem:[%s267] ss:$6 sm:$0xff]
    %s269 = scalar_lea.vmem [#allocation2], 389
    %v270 = vld [vmem:[%s269] ss:$6 sm:$0xff]
    %s271 = scalar_lea.vmem [#allocation2], 437
    %v272 = vld [vmem:[%s271] ss:$6 sm:$0xff]
    %s273 = scalar_lea.vmem [#allocation2], 485
    %v274 = vld [vmem:[%s273] ss:$6 sm:$0xff]
    %s275 = scalar_lea.vmem [#allocation2], 533
    %v276 = vld [vmem:[%s275] ss:$6 sm:$0xff]
    %s277 = scalar_lea.vmem [#allocation2], 581
    %v278 = vld [vmem:[%s277] ss:$6 sm:$0xff]
    %s279 = scalar_lea.vmem [#allocation2], 629
    %v280 = vld [vmem:[%s279] ss:$6 sm:$0xff]
    %s281 = scalar_lea.vmem [#allocation2], 677
    %v282 = vld [vmem:[%s281] ss:$6 sm:$0xff]
    %s283 = scalar_lea.vmem [#allocation2], 725
    %v284 = vld [vmem:[%s283] ss:$6 sm:$0xff]
    %v285 = vmax.f32 %v237, %v254
    %v286 = vmax.f32 %v238, %v256
    %v287 = vmax.f32 %v239, %v258
    %v288 = vmax.f32 %v240, %v260
    %v289 = vmax.f32 %v241, %v262
    %v290 = vmax.f32 %v242, %v264
    %v291 = vmax.f32 %v243, %v266
    %v292 = vmax.f32 %v244, %v268
    %v293 = vmax.f32 %v245, %v270
    %v294 = vmax.f32 %v246, %v272
    %v295 = vmax.f32 %v247, %v274
    %v296 = vmax.f32 %v248, %v276
    %v297 = vmax.f32 %v249, %v278
    %v298 = vmax.f32 %v250, %v280
    %v299 = vmax.f32 %v251, %v282
    %v300 = vmax.f32 %v252, %v284
    %v301 = vld [vmem:[%s2] sm:$0xff]
    %v302 = vld [vmem:[%s2 + $0x8] sm:$0x3]
    %vm303 = vcmask 48128
    %v304 = vsel %vm303, %v285, -inf
    %305 = vmax.xlane.f32.xlu0 %v304
    %v306 = vpop.xlane.xlu0 %305
    %v307 = vsel %vm303, %v286, -inf
    %308 = vmax.xlane.f32.xlu0 %v307
    %v309 = vpop.xlane.xlu0 %308
    %v310 = vsel %vm303, %v287, -inf
    %311 = vmax.xlane.f32.xlu0 %v310
    %v312 = vpop.xlane.xlu0 %311
    %v313 = vsel %vm303, %v288, -inf
    %314 = vmax.xlane.f32.xlu0 %v313
    %v315 = vpop.xlane.xlu0 %314
    %v316 = vsel %vm303, %v289, -inf
    %317 = vmax.xlane.f32.xlu0 %v316
    %v318 = vpop.xlane.xlu0 %317
    %v319 = vsel %vm303, %v290, -inf
    %320 = vmax.xlane.f32.xlu0 %v319
    %v321 = vpop.xlane.xlu0 %320
    %v322 = vsel %vm303, %v291, -inf
    %323 = vmax.xlane.f32.xlu0 %v322
    %v324 = vpop.xlane.xlu0 %323
    %v325 = vsel %vm303, %v292, -inf
    %326 = vmax.xlane.f32.xlu0 %v325
    %v327 = vpop.xlane.xlu0 %326
    %v328 = vsel %vm303, %v293, -inf
    %329 = vmax.xlane.f32.xlu0 %v328
    %v330 = vpop.xlane.xlu0 %329
    %v331 = vsel %vm303, %v294, -inf
    %332 = vmax.xlane.f32.xlu0 %v331
    %v333 = vpop.xlane.xlu0 %332
    %v334 = vsel %vm303, %v295, -inf
    %335 = vmax.xlane.f32.xlu0 %v334
    %v336 = vpop.xlane.xlu0 %335
    %v337 = vsel %vm303, %v296, -inf
    %338 = vmax.xlane.f32.xlu0 %v337
    %v339 = vpop.xlane.xlu0 %338
    %v340 = vsel %vm303, %v297, -inf
    %341 = vmax.xlane.f32.xlu0 %v340
    %v342 = vpop.xlane.xlu0 %341
    %v343 = vsel %vm303, %v298, -inf
    %344 = vmax.xlane.f32.xlu0 %v343
    %v345 = vpop.xlane.xlu0 %344
    %v346 = vsel %vm303, %v299, -inf
    %347 = vmax.xlane.f32.xlu0 %v346
    %v348 = vpop.xlane.xlu0 %347
    %v349 = vsel %vm303, %v300, -inf
    %350 = vmax.xlane.f32.xlu0 %v349
    %v351 = vpop.xlane.xlu0 %350
    %v352 = vld [vmem:[%s1] sm:$0xff]
    %v353 = vld [vmem:[%s1 + $0x8] sm:$0x3]
    %354 = vmatpush.msra.mxu0 %v351
    %355 = vmatpush.msra.mxu0 %v348
    %356 = vmatpush.msra.mxu0 %v345
    %357 = vmatpush.msra.mxu0 %v342
    %358 = vmatpush.msra.mxu0 %v339
    %359 = vmatpush.msra.mxu0 %v336
    %360 = vmatpush.msra.mxu0 %v333
    %361 = vmatpush.msra.mxu0 %v330
    %362 = vmatpush.msra.mxu0 %v327
    %363 = vmatpush.msra.mxu0 %v324
    %364 = vmatpush.msra.mxu0 %v321
    %365 = vmatpush.msra.mxu0 %v318
    %366 = vmatpush.msra.mxu0 %v315
    %367 = vmatpush.msra.mxu0 %v312
    %368 = vmatpush.msra.mxu0 %v309
    %369 = vmatpush.msra.mxu0 %v306
    %370 = vmatmul.f32.gmra.mxu0 %v352
    %v371 = vpop.f32.mrf.mxu0
    %v372 = vadd.f32 0.0, %v371
    %373 = vmatmul.f32.gmra.mxu0 %v353
    %v374 = vpop.f32.mrf.mxu0
    %v375 = vadd.f32 0.0, %v374
    %376 = vdwg.mxu0
    %v377 = vadd.f32 %v301, %v372
    %v378 = vadd.f32 %v302, %v375
    %vm379 = vcmask 97328
    %v380 = vsel %vm379, %v285, -inf
    %381 = vmax.xlane.f32.xlu0 %v380
    %v382 = vpop.xlane.xlu0 %381
    %v383 = vsel %vm379, %v286, -inf
    %384 = vmax.xlane.f32.xlu0 %v383
    %v385 = vpop.xlane.xlu0 %384
    %v386 = vsel %vm379, %v287, -inf
    %387 = vmax.xlane.f32.xlu0 %v386
    %v388 = vpop.xlane.xlu0 %387
    %v389 = vsel %vm379, %v288, -inf
    %390 = vmax.xlane.f32.xlu0 %v389
    %v391 = vpop.xlane.xlu0 %390
    %v392 = vsel %vm379, %v289, -inf
    %393 = vmax.xlane.f32.xlu0 %v392
    %v394 = vpop.xlane.xlu0 %393
    %v395 = vsel %vm379, %v290, -inf
    %396 = vmax.xlane.f32.xlu0 %v395
    %v397 = vpop.xlane.xlu0 %396
    %v398 = vsel %vm379, %v291, -inf
    %399 = vmax.xlane.f32.xlu0 %v398
    %v400 = vpop.xlane.xlu0 %399
    %v401 = vsel %vm379, %v292, -inf
    %402 = vmax.xlane.f32.xlu0 %v401
    %v403 = vpop.xlane.xlu0 %402
    %v404 = vsel %vm379, %v293, -inf
    %405 = vmax.xlane.f32.xlu0 %v404
    %v406 = vpop.xlane.xlu0 %405
    %v407 = vsel %vm379, %v294, -inf
    %408 = vmax.xlane.f32.xlu0 %v407
    %v409 = vpop.xlane.xlu0 %408
    %v410 = vsel %vm379, %v295, -inf
    %411 = vmax.xlane.f32.xlu0 %v410
    %v412 = vpop.xlane.xlu0 %411
    %v413 = vsel %vm379, %v296, -inf
    %414 = vmax.xlane.f32.xlu0 %v413
    %v415 = vpop.xlane.xlu0 %414
    %v416 = vsel %vm379, %v297, -inf
    %417 = vmax.xlane.f32.xlu0 %v416
    %v418 = vpop.xlane.xlu0 %417
    %v419 = vsel %vm379, %v298, -inf
    %420 = vmax.xlane.f32.xlu0 %v419
    %v421 = vpop.xlane.xlu0 %420
    %v422 = vsel %vm379, %v299, -inf
    %423 = vmax.xlane.f32.xlu0 %v422
    %v424 = vpop.xlane.xlu0 %423
    %v425 = vsel %vm379, %v300, -inf
    %426 = vmax.xlane.f32.xlu0 %v425
    %v427 = vpop.xlane.xlu0 %426
    %s428 = scalar_lea.vmem %s1, 16
    %v429 = vld [vmem:[%s428] sm:$0xff]
    %v430 = vld [vmem:[%s428 + $0x8] sm:$0x3]
    %431 = vmatpush.msra.mxu0 %v427
    %432 = vmatpush.msra.mxu0 %v424
    %433 = vmatpush.msra.mxu0 %v421
    %434 = vmatpush.msra.mxu0 %v418
    %435 = vmatpush.msra.mxu0 %v415
    %436 = vmatpush.msra.mxu0 %v412
    %437 = vmatpush.msra.mxu0 %v409
    %438 = vmatpush.msra.mxu0 %v406
    %439 = vmatpush.msra.mxu0 %v403
    %440 = vmatpush.msra.mxu0 %v400
    %441 = vmatpush.msra.mxu0 %v397
    %442 = vmatpush.msra.mxu0 %v394
    %443 = vmatpush.msra.mxu0 %v391
    %444 = vmatpush.msra.mxu0 %v388
    %445 = vmatpush.msra.mxu0 %v385
    %446 = vmatpush.msra.mxu0 %v382
    %447 = vmatmul.f32.gmra.mxu0 %v429
    %v448 = vpop.f32.mrf.mxu0
    %v449 = vadd.f32 0.0, %v448
    %450 = vmatmul.f32.gmra.mxu0 %v430
    %v451 = vpop.f32.mrf.mxu0
    %v452 = vadd.f32 0.0, %v451
    %453 = vdwg.mxu0
    %v454 = vadd.f32 %v377, %v449
    %v455 = vadd.f32 %v378, %v452
    %vm456 = vcmask 146528
    %v457 = vsel %vm456, %v285, -inf
    %458 = vmax.xlane.f32.xlu0 %v457
    %v459 = vpop.xlane.xlu0 %458
    %v460 = vsel %vm456, %v286, -inf
    %461 = vmax.xlane.f32.xlu0 %v460
    %v462 = vpop.xlane.xlu0 %461
    %v463 = vsel %vm456, %v287, -inf
    %464 = vmax.xlane.f32.xlu0 %v463
    %v465 = vpop.xlane.xlu0 %464
    %v466 = vsel %vm456, %v288, -inf
    %467 = vmax.xlane.f32.xlu0 %v466
    %v468 = vpop.xlane.xlu0 %467
    %v469 = vsel %vm456, %v289, -inf
    %470 = vmax.xlane.f32.xlu0 %v469
    %v471 = vpop.xlane.xlu0 %470
    %v472 = vsel %vm456, %v290, -inf
    %473 = vmax.xlane.f32.xlu0 %v472
    %v474 = vpop.xlane.xlu0 %473
    %v475 = vsel %vm456, %v291, -inf
    %476 = vmax.xlane.f32.xlu0 %v475
    %v477 = vpop.xlane.xlu0 %476
    %v478 = vsel %vm456, %v292, -inf
    %479 = vmax.xlane.f32.xlu0 %v478
    %v480 = vpop.xlane.xlu0 %479
    %v481 = vsel %vm456, %v293, -inf
    %482 = vmax.xlane.f32.xlu0 %v481
    %v483 = vpop.xlane.xlu0 %482
    %v484 = vsel %vm456, %v294, -inf
    %485 = vmax.xlane.f32.xlu0 %v484
    %v486 = vpop.xlane.xlu0 %485
    %v487 = vsel %vm456, %v295, -inf
    %488 = vmax.xlane.f32.xlu0 %v487
    %v489 = vpop.xlane.xlu0 %488
    %v490 = vsel %vm456, %v296, -inf
    %491 = vmax.xlane.f32.xlu0 %v490
    %v492 = vpop.xlane.xlu0 %491
    %v493 = vsel %vm456, %v297, -inf
    %494 = vmax.xlane.f32.xlu0 %v493
    %v495 = vpop.xlane.xlu0 %494
    %v496 = vsel %vm456, %v298, -inf
    %497 = vmax.xlane.f32.xlu0 %v496
    %v498 = vpop.xlane.xlu0 %497
    %v499 = vsel %vm456, %v299, -inf
    %500 = vmax.xlane.f32.xlu0 %v499
    %v501 = vpop.xlane.xlu0 %500
    %v502 = vsel %vm456, %v300, -inf
    %503 = vmax.xlane.f32.xlu0 %v502
    %v504 = vpop.xlane.xlu0 %503
    %s505 = scalar_lea.vmem %s1, 32
    %v506 = vld [vmem:[%s505] sm:$0xff]
    %v507 = vld [vmem:[%s505 + $0x8] sm:$0x3]
    %508 = vmatpush.msra.mxu0 %v504
    %509 = vmatpush.msra.mxu0 %v501
    %510 = vmatpush.msra.mxu0 %v498
    %511 = vmatpush.msra.mxu0 %v495
    %512 = vmatpush.msra.mxu0 %v492
    %513 = vmatpush.msra.mxu0 %v489
    %514 = vmatpush.msra.mxu0 %v486
    %515 = vmatpush.msra.mxu0 %v483
    %516 = vmatpush.msra.mxu0 %v480
    %517 = vmatpush.msra.mxu0 %v477
    %518 = vmatpush.msra.mxu0 %v474
    %519 = vmatpush.msra.mxu0 %v471
    %520 = vmatpush.msra.mxu0 %v468
    %521 = vmatpush.msra.mxu0 %v465
    %522 = vmatpush.msra.mxu0 %v462
    %523 = vmatpush.msra.mxu0 %v459
    %524 = vmatmul.f32.gmra.mxu0 %v506
    %v525 = vpop.f32.mrf.mxu0
    %v526 = vadd.f32 0.0, %v525
    %527 = vmatmul.f32.gmra.mxu0 %v507
    %v528 = vpop.f32.mrf.mxu0
    %v529 = vadd.f32 0.0, %v528
    %530 = vdwg.mxu0
    %v531 = vadd.f32 %v454, %v526
    %v532 = vadd.f32 %v455, %v529
    %vm533 = vcmask 195728
    %v534 = vsel %vm533, %v285, -inf
    %535 = vmax.xlane.f32.xlu0 %v534
    %v536 = vpop.xlane.xlu0 %535
    %v537 = vsel %vm533, %v286, -inf
    %538 = vmax.xlane.f32.xlu0 %v537
    %v539 = vpop.xlane.xlu0 %538
    %v540 = vsel %vm533, %v287, -inf
    %541 = vmax.xlane.f32.xlu0 %v540
    %v542 = vpop.xlane.xlu0 %541
    %v543 = vsel %vm533, %v288, -inf
    %544 = vmax.xlane.f32.xlu0 %v543
    %v545 = vpop.xlane.xlu0 %544
    %v546 = vsel %vm533, %v289, -inf
    %547 = vmax.xlane.f32.xlu0 %v546
    %v548 = vpop.xlane.xlu0 %547
    %v549 = vsel %vm533, %v290, -inf
    %550 = vmax.xlane.f32.xlu0 %v549
    %v551 = vpop.xlane.xlu0 %550
    %v552 = vsel %vm533, %v291, -inf
    %553 = vmax.xlane.f32.xlu0 %v552
    %v554 = vpop.xlane.xlu0 %553
    %v555 = vsel %vm533, %v292, -inf
    %556 = vmax.xlane.f32.xlu0 %v555
    %v557 = vpop.xlane.xlu0 %556
    %v558 = vsel %vm533, %v293, -inf
    %559 = vmax.xlane.f32.xlu0 %v558
    %v560 = vpop.xlane.xlu0 %559
    %v561 = vsel %vm533, %v294, -inf
    %562 = vmax.xlane.f32.xlu0 %v561
    %v563 = vpop.xlane.xlu0 %562
    %v564 = vsel %vm533, %v295, -inf
    %565 = vmax.xlane.f32.xlu0 %v564
    %v566 = vpop.xlane.xlu0 %565
    %v567 = vsel %vm533, %v296, -inf
    %568 = vmax.xlane.f32.xlu0 %v567
    %v569 = vpop.xlane.xlu0 %568
    %v570 = vsel %vm533, %v297, -inf
    %571 = vmax.xlane.f32.xlu0 %v570
    %v572 = vpop.xlane.xlu0 %571
    %v573 = vsel %vm533, %v298, -inf
    %574 = vmax.xlane.f32.xlu0 %v573
    %v575 = vpop.xlane.xlu0 %574
    %v576 = vsel %vm533, %v299, -inf
    %577 = vmax.xlane.f32.xlu0 %v576
    %v578 = vpop.xlane.xlu0 %577
    %v579 = vsel %vm533, %v300, -inf
    %580 = vmax.xlane.f32.xlu0 %v579
    %v581 = vpop.xlane.xlu0 %580
    %s582 = scalar_lea.vmem %s1, 48
    %v583 = vld [vmem:[%s582] sm:$0xff]
    %v584 = vld [vmem:[%s582 + $0x8] sm:$0x3]
    %585 = vmatpush.msra.mxu0 %v581
    %586 = vmatpush.msra.mxu0 %v578
    %587 = vmatpush.msra.mxu0 %v575
    %588 = vmatpush.msra.mxu0 %v572
    %589 = vmatpush.msra.mxu0 %v569
    %590 = vmatpush.msra.mxu0 %v566
    %591 = vmatpush.msra.mxu0 %v563
    %592 = vmatpush.msra.mxu0 %v560
    %593 = vmatpush.msra.mxu0 %v557
    %594 = vmatpush.msra.mxu0 %v554
    %595 = vmatpush.msra.mxu0 %v551
    %596 = vmatpush.msra.mxu0 %v548
    %597 = vmatpush.msra.mxu0 %v545
    %598 = vmatpush.msra.mxu0 %v542
    %599 = vmatpush.msra.mxu0 %v539
    %600 = vmatpush.msra.mxu0 %v536
    %601 = vmatmul.f32.gmra.mxu0 %v583
    %v602 = vpop.f32.mrf.mxu0
    %v603 = vadd.f32 0.0, %v602
    %604 = vmatmul.f32.gmra.mxu0 %v584
    %v605 = vpop.f32.mrf.mxu0
    %v606 = vadd.f32 0.0, %v605
    %607 = vdwg.mxu0
    %v608 = vadd.f32 %v531, %v603
    %v609 = vadd.f32 %v532, %v606
    %vm610 = vcmask 244928
    %v611 = vsel %vm610, %v285, -inf
    %612 = vmax.xlane.f32.xlu0 %v611
    %v613 = vpop.xlane.xlu0 %612
    %v614 = vsel %vm610, %v286, -inf
    %615 = vmax.xlane.f32.xlu0 %v614
    %v616 = vpop.xlane.xlu0 %615
    %v617 = vsel %vm610, %v287, -inf
    %618 = vmax.xlane.f32.xlu0 %v617
    %v619 = vpop.xlane.xlu0 %618
    %v620 = vsel %vm610, %v288, -inf
    %621 = vmax.xlane.f32.xlu0 %v620
    %v622 = vpop.xlane.xlu0 %621
    %v623 = vsel %vm610, %v289, -inf
    %624 = vmax.xlane.f32.xlu0 %v623
    %v625 = vpop.xlane.xlu0 %624
    %v626 = vsel %vm610, %v290, -inf
    %627 = vmax.xlane.f32.xlu0 %v626
    %v628 = vpop.xlane.xlu0 %627
    %v629 = vsel %vm610, %v291, -inf
    %630 = vmax.xlane.f32.xlu0 %v629
    %v631 = vpop.xlane.xlu0 %630
    %v632 = vsel %vm610, %v292, -inf
    %633 = vmax.xlane.f32.xlu0 %v632
    %v634 = vpop.xlane.xlu0 %633
    %v635 = vsel %vm610, %v293, -inf
    %636 = vmax.xlane.f32.xlu0 %v635
    %v637 = vpop.xlane.xlu0 %636
    %v638 = vsel %vm610, %v294, -inf
    %639 = vmax.xlane.f32.xlu0 %v638
    %v640 = vpop.xlane.xlu0 %639
    %v641 = vsel %vm610, %v295, -inf
    %642 = vmax.xlane.f32.xlu0 %v641
    %v643 = vpop.xlane.xlu0 %642
    %v644 = vsel %vm610, %v296, -inf
    %645 = vmax.xlane.f32.xlu0 %v644
    %v646 = vpop.xlane.xlu0 %645
    %v647 = vsel %vm610, %v297, -inf
    %648 = vmax.xlane.f32.xlu0 %v647
    %v649 = vpop.xlane.xlu0 %648
    %v650 = vsel %vm610, %v298, -inf
    %651 = vmax.xlane.f32.xlu0 %v650
    %v652 = vpop.xlane.xlu0 %651
    %v653 = vsel %vm610, %v299, -inf
    %654 = vmax.xlane.f32.xlu0 %v653
    %v655 = vpop.xlane.xlu0 %654
    %v656 = vsel %vm610, %v300, -inf
    %657 = vmax.xlane.f32.xlu0 %v656
    %v658 = vpop.xlane.xlu0 %657
    %s659 = scalar_lea.vmem %s1, 64
    %v660 = vld [vmem:[%s659] sm:$0xff]
    %v661 = vld [vmem:[%s659 + $0x8] sm:$0x3]
    %662 = vmatpush.msra.mxu0 %v658
    %663 = vmatpush.msra.mxu0 %v655
    %664 = vmatpush.msra.mxu0 %v652
    %665 = vmatpush.msra.mxu0 %v649
    %666 = vmatpush.msra.mxu0 %v646
    %667 = vmatpush.msra.mxu0 %v643
    %668 = vmatpush.msra.mxu0 %v640
    %669 = vmatpush.msra.mxu0 %v637
    %670 = vmatpush.msra.mxu0 %v634
    %671 = vmatpush.msra.mxu0 %v631
    %672 = vmatpush.msra.mxu0 %v628
    %673 = vmatpush.msra.mxu0 %v625
    %674 = vmatpush.msra.mxu0 %v622
    %675 = vmatpush.msra.mxu0 %v619
    %676 = vmatpush.msra.mxu0 %v616
    %677 = vmatpush.msra.mxu0 %v613
    %678 = vmatmul.f32.gmra.mxu0 %v660
    %v679 = vpop.f32.mrf.mxu0
    %v680 = vadd.f32 0.0, %v679
    %681 = vmatmul.f32.gmra.mxu0 %v661
    %v682 = vpop.f32.mrf.mxu0
    %v683 = vadd.f32 0.0, %v682
    %684 = vdwg.mxu0
    %v685 = vadd.f32 %v608, %v680
    %v686 = vadd.f32 %v609, %v683
    %vm687 = vcmask 294128
    %v688 = vsel %vm687, %v285, -inf
    %689 = vmax.xlane.f32.xlu0 %v688
    %v690 = vpop.xlane.xlu0 %689
    %v691 = vsel %vm687, %v286, -inf
    %692 = vmax.xlane.f32.xlu0 %v691
    %v693 = vpop.xlane.xlu0 %692
    %v694 = vsel %vm687, %v287, -inf
    %695 = vmax.xlane.f32.xlu0 %v694
    %v696 = vpop.xlane.xlu0 %695
    %v697 = vsel %vm687, %v288, -inf
    %698 = vmax.xlane.f32.xlu0 %v697
    %v699 = vpop.xlane.xlu0 %698
    %v700 = vsel %vm687, %v289, -inf
    %701 = vmax.xlane.f32.xlu0 %v700
    %v702 = vpop.xlane.xlu0 %701
    %v703 = vsel %vm687, %v290, -inf
    %704 = vmax.xlane.f32.xlu0 %v703
    %v705 = vpop.xlane.xlu0 %704
    %v706 = vsel %vm687, %v291, -inf
    %707 = vmax.xlane.f32.xlu0 %v706
    %v708 = vpop.xlane.xlu0 %707
    %v709 = vsel %vm687, %v292, -inf
    %710 = vmax.xlane.f32.xlu0 %v709
    %v711 = vpop.xlane.xlu0 %710
    %v712 = vsel %vm687, %v293, -inf
    %713 = vmax.xlane.f32.xlu0 %v712
    %v714 = vpop.xlane.xlu0 %713
    %v715 = vsel %vm687, %v294, -inf
    %716 = vmax.xlane.f32.xlu0 %v715
    %v717 = vpop.xlane.xlu0 %716
    %v718 = vsel %vm687, %v295, -inf
    %719 = vmax.xlane.f32.xlu0 %v718
    %v720 = vpop.xlane.xlu0 %719
    %v721 = vsel %vm687, %v296, -inf
    %722 = vmax.xlane.f32.xlu0 %v721
    %v723 = vpop.xlane.xlu0 %722
    %v724 = vsel %vm687, %v297, -inf
    %725 = vmax.xlane.f32.xlu0 %v724
    %v726 = vpop.xlane.xlu0 %725
    %v727 = vsel %vm687, %v298, -inf
    %728 = vmax.xlane.f32.xlu0 %v727
    %v729 = vpop.xlane.xlu0 %728
    %v730 = vsel %vm687, %v299, -inf
    %731 = vmax.xlane.f32.xlu0 %v730
    %v732 = vpop.xlane.xlu0 %731
    %v733 = vsel %vm687, %v300, -inf
    %734 = vmax.xlane.f32.xlu0 %v733
    %v735 = vpop.xlane.xlu0 %734
    %s736 = scalar_lea.vmem %s1, 80
    %v737 = vld [vmem:[%s736] sm:$0xff]
    %v738 = vld [vmem:[%s736 + $0x8] sm:$0x3]
    %739 = vmatpush.msra.mxu0 %v735
    %740 = vmatpush.msra.mxu0 %v732
    %741 = vmatpush.msra.mxu0 %v729
    %742 = vmatpush.msra.mxu0 %v726
    %743 = vmatpush.msra.mxu0 %v723
    %744 = vmatpush.msra.mxu0 %v720
    %745 = vmatpush.msra.mxu0 %v717
    %746 = vmatpush.msra.mxu0 %v714
    %747 = vmatpush.msra.mxu0 %v711
    %748 = vmatpush.msra.mxu0 %v708
    %749 = vmatpush.msra.mxu0 %v705
    %750 = vmatpush.msra.mxu0 %v702
    %751 = vmatpush.msra.mxu0 %v699
    %752 = vmatpush.msra.mxu0 %v696
    %753 = vmatpush.msra.mxu0 %v693
    %754 = vmatpush.msra.mxu0 %v690
    %755 = vmatmul.f32.gmra.mxu0 %v737
    %v756 = vpop.f32.mrf.mxu0
    %v757 = vadd.f32 0.0, %v756
    %758 = vmatmul.f32.gmra.mxu0 %v738
    %v759 = vpop.f32.mrf.mxu0
    %v760 = vadd.f32 0.0, %v759
    %761 = vdwg.mxu0
    %v762 = vadd.f32 %v685, %v757
    %v763 = vadd.f32 %v686, %v760
    %vm764 = vcmask 343328
    %v765 = vsel %vm764, %v285, -inf
    %766 = vmax.xlane.f32.xlu0 %v765
    %v767 = vpop.xlane.xlu0 %766
    %v768 = vsel %vm764, %v286, -inf
    %769 = vmax.xlane.f32.xlu0 %v768
    %v770 = vpop.xlane.xlu0 %769
    %v771 = vsel %vm764, %v287, -inf
    %772 = vmax.xlane.f32.xlu0 %v771
    %v773 = vpop.xlane.xlu0 %772
    %v774 = vsel %vm764, %v288, -inf
    %775 = vmax.xlane.f32.xlu0 %v774
    %v776 = vpop.xlane.xlu0 %775
    %v777 = vsel %vm764, %v289, -inf
    %778 = vmax.xlane.f32.xlu0 %v777
    %v779 = vpop.xlane.xlu0 %778
    %v780 = vsel %vm764, %v290, -inf
    %781 = vmax.xlane.f32.xlu0 %v780
    %v782 = vpop.xlane.xlu0 %781
    %v783 = vsel %vm764, %v291, -inf
    %784 = vmax.xlane.f32.xlu0 %v783
    %v785 = vpop.xlane.xlu0 %784
    %v786 = vsel %vm764, %v292, -inf
    %787 = vmax.xlane.f32.xlu0 %v786
    %v788 = vpop.xlane.xlu0 %787
    %v789 = vsel %vm764, %v293, -inf
    %790 = vmax.xlane.f32.xlu0 %v789
    %v791 = vpop.xlane.xlu0 %790
    %v792 = vsel %vm764, %v294, -inf
    %793 = vmax.xlane.f32.xlu0 %v792
    %v794 = vpop.xlane.xlu0 %793
    %v795 = vsel %vm764, %v295, -inf
    %796 = vmax.xlane.f32.xlu0 %v795
    %v797 = vpop.xlane.xlu0 %796
    %v798 = vsel %vm764, %v296, -inf
    %799 = vmax.xlane.f32.xlu0 %v798
    %v800 = vpop.xlane.xlu0 %799
    %v801 = vsel %vm764, %v297, -inf
    %802 = vmax.xlane.f32.xlu0 %v801
    %v803 = vpop.xlane.xlu0 %802
    %v804 = vsel %vm764, %v298, -inf
    %805 = vmax.xlane.f32.xlu0 %v804
    %v806 = vpop.xlane.xlu0 %805
    %v807 = vsel %vm764, %v299, -inf
    %808 = vmax.xlane.f32.xlu0 %v807
    %v809 = vpop.xlane.xlu0 %808
    %v810 = vsel %vm764, %v300, -inf
    %811 = vmax.xlane.f32.xlu0 %v810
    %v812 = vpop.xlane.xlu0 %811
    %s813 = scalar_lea.vmem %s1, 96
    %v814 = vld [vmem:[%s813] sm:$0xff]
    %v815 = vld [vmem:[%s813 + $0x8] sm:$0x3]
    %816 = vmatpush.msra.mxu0 %v812
    %817 = vmatpush.msra.mxu0 %v809
    %818 = vmatpush.msra.mxu0 %v806
    %819 = vmatpush.msra.mxu0 %v803
    %820 = vmatpush.msra.mxu0 %v800
    %821 = vmatpush.msra.mxu0 %v797
    %822 = vmatpush.msra.mxu0 %v794
    %823 = vmatpush.msra.mxu0 %v791
    %824 = vmatpush.msra.mxu0 %v788
    %825 = vmatpush.msra.mxu0 %v785
    %826 = vmatpush.msra.mxu0 %v782
    %827 = vmatpush.msra.mxu0 %v779
    %828 = vmatpush.msra.mxu0 %v776
    %829 = vmatpush.msra.mxu0 %v773
    %830 = vmatpush.msra.mxu0 %v770
    %831 = vmatpush.msra.mxu0 %v767
    %832 = vmatmul.f32.gmra.mxu0 %v814
    %v833 = vpop.f32.mrf.mxu0
    %v834 = vadd.f32 0.0, %v833
    %835 = vmatmul.f32.gmra.mxu0 %v815
    %v836 = vpop.f32.mrf.mxu0
    %v837 = vadd.f32 0.0, %v836
    %838 = vdwg.mxu0
    %v839 = vadd.f32 %v762, %v834
    %v840 = vadd.f32 %v763, %v837
    %vm841 = vcmask 392528
    %v842 = vsel %vm841, %v285, -inf
    %843 = vmax.xlane.f32.xlu0 %v842
    %v844 = vpop.xlane.xlu0 %843
    %v845 = vsel %vm841, %v286, -inf
    %846 = vmax.xlane.f32.xlu0 %v845
    %v847 = vpop.xlane.xlu0 %846
    %v848 = vsel %vm841, %v287, -inf
    %849 = vmax.xlane.f32.xlu0 %v848
    %v850 = vpop.xlane.xlu0 %849
    %v851 = vsel %vm841, %v288, -inf
    %852 = vmax.xlane.f32.xlu0 %v851
    %v853 = vpop.xlane.xlu0 %852
    %v854 = vsel %vm841, %v289, -inf
    %855 = vmax.xlane.f32.xlu0 %v854
    %v856 = vpop.xlane.xlu0 %855
    %v857 = vsel %vm841, %v290, -inf
    %858 = vmax.xlane.f32.xlu0 %v857
    %v859 = vpop.xlane.xlu0 %858
    %v860 = vsel %vm841, %v291, -inf
    %861 = vmax.xlane.f32.xlu0 %v860
    %v862 = vpop.xlane.xlu0 %861
    %v863 = vsel %vm841, %v292, -inf
    %864 = vmax.xlane.f32.xlu0 %v863
    %v865 = vpop.xlane.xlu0 %864
    %v866 = vsel %vm841, %v293, -inf
    %867 = vmax.xlane.f32.xlu0 %v866
    %v868 = vpop.xlane.xlu0 %867
    %v869 = vsel %vm841, %v294, -inf
    %870 = vmax.xlane.f32.xlu0 %v869
    %v871 = vpop.xlane.xlu0 %870
    %v872 = vsel %vm841, %v295, -inf
    %873 = vmax.xlane.f32.xlu0 %v872
    %v874 = vpop.xlane.xlu0 %873
    %v875 = vsel %vm841, %v296, -inf
    %876 = vmax.xlane.f32.xlu0 %v875
    %v877 = vpop.xlane.xlu0 %876
    %v878 = vsel %vm841, %v297, -inf
    %879 = vmax.xlane.f32.xlu0 %v878
    %v880 = vpop.xlane.xlu0 %879
    %v881 = vsel %vm841, %v298, -inf
    %882 = vmax.xlane.f32.xlu0 %v881
    %v883 = vpop.xlane.xlu0 %882
    %v884 = vsel %vm841, %v299, -inf
    %885 = vmax.xlane.f32.xlu0 %v884
    %v886 = vpop.xlane.xlu0 %885
    %v887 = vsel %vm841, %v300, -inf
    %888 = vmax.xlane.f32.xlu0 %v887
    %v889 = vpop.xlane.xlu0 %888
    %s890 = scalar_lea.vmem %s1, 112
    %v891 = vld [vmem:[%s890] sm:$0xff]
    %v892 = vld [vmem:[%s890 + $0x8] sm:$0x3]
    %893 = vmatpush.msra.mxu0 %v889
    %894 = vmatpush.msra.mxu0 %v886
    %895 = vmatpush.msra.mxu0 %v883
    %896 = vmatpush.msra.mxu0 %v880
    %897 = vmatpush.msra.mxu0 %v877
    %898 = vmatpush.msra.mxu0 %v874
    %899 = vmatpush.msra.mxu0 %v871
    %900 = vmatpush.msra.mxu0 %v868
    %901 = vmatpush.msra.mxu0 %v865
    %902 = vmatpush.msra.mxu0 %v862
    %903 = vmatpush.msra.mxu0 %v859
    %904 = vmatpush.msra.mxu0 %v856
    %905 = vmatpush.msra.mxu0 %v853
    %906 = vmatpush.msra.mxu0 %v850
    %907 = vmatpush.msra.mxu0 %v847
    %908 = vmatpush.msra.mxu0 %v844
    %909 = vmatmul.f32.gmra.mxu0 %v891
    %v910 = vpop.f32.mrf.mxu0
    %v911 = vadd.f32 0.0, %v910
    %912 = vmatmul.f32.gmra.mxu0 %v892
    %v913 = vpop.f32.mrf.mxu0
    %v914 = vadd.f32 0.0, %v913
    %915 = vdwg.mxu0
    %v916 = vadd.f32 %v839, %v911
    %v917 = vadd.f32 %v840, %v914
    %vm918 = vcmask 7168
    %919 = vst.msk [vmem:[%s3] sm:$0xff] %vm918, %v916
    %vm920 = vcmask 1024
    %921 = vst.msk [vmem:[%s3 + $0x8] sm:$0x3] %vm920, %v917
    // Predicated region
    $region18: #{general_ee_model_forward.1} parent=1 // pred_check
      _
    $region19: #{general_ee_model_forward.1} parent=1 // pred_check_branch
      %923 = sbr.rel (0) target = $region21
    $region20: #{general_ee_model_forward.1} parent=1 // pred_region
      _
    $region21: #{general_ee_model_forward.1} parent=1 // pred_fallthru
      _
    // Predicated region
    $region22: #{general_ee_model_forward.1} parent=1 // pred_check
      _
    $region23: #{general_ee_model_forward.1} parent=1 // pred_check_branch
      %925 = sbr.rel (0) target = $region25
    $region24: #{general_ee_model_forward.1} parent=1 // pred_region
      _
    $region25: #{general_ee_model_forward.1} parent=1 // pred_fallthru
      _
    %926 = vsyncpa [#allocation3], 1

</llo_original>
